<compile_context>
chip_gen: v7x
topology: tpu7x:2x2x1
jax: 0.10.0
libtpu: 0.0.40
codegen_flags: <defaults>
</compile_context>

<pallas_src>
import functools
import math

import jax
import jax.numpy as jnp
import numpy as np
from jax.experimental import pallas as pl
from jax.experimental.pallas import tpu as pltpu


def _round_up(x, m):
    return (x + m - 1) // m * m


def _focal_loss_kernel(pred_ref, lab_ref, cls_ref, bmat_ref, out_ref, *,
                       gamma, alpha, g, ts, nslab, approx):
    """One grid step: (tm, Ceff) logits + (tm, g) labels -> accumulate a (1, Ceff) partial."""
    i = pl.program_id(1)

    # Output block index is constant across the reduction axis i, so it stays resident
    # in VMEM for this p (classic accumulator pattern).
    @pl.when(i == 0)
    def _():
        out_ref[...] = jnp.zeros_like(out_ref)

    cls = cls_ref[...]                                  # (ts, Ceff) f32 lane class ids
    ceff = cls.shape[1]
    if g > 1:
        bmat = bmat_ref[...]                            # (g, Ceff) 0/1 block-diag matrix
    alpha_f = jnp.float32(alpha)
    one_m_alpha = jnp.float32(1.0 - alpha)

    acc = jnp.zeros((1, ceff), jnp.float32)

    # Static slab loop: each slab's intermediates are a handful of vregs, so the
    # elementwise chain stays in registers instead of round-tripping VMEM (vst-bound
    # otherwise, worst on v5e's single store slot).
    for s in range(nslab):
        x = pred_ref[s * ts:(s + 1) * ts, :].astype(jnp.float32)    # (ts, Ceff)
        lab = lab_ref[s * ts:(s + 1) * ts, :].astype(jnp.float32)   # (ts, g)

        # Broadcast each grouped sample's label across its C lanes on the (idle) MXU.
        # Exactly one 0/1 term contributes per output, so values are integer-exact for
        # C <= 256 even under a bf16 MXU pass; the 0.5-tolerance compare below absorbs
        # any residual rounding.
        if g == 1:
            lab_b = lab                                 # (ts, 1): lane-broadcasts below
        else:
            lab_b = jnp.dot(lab, bmat, preferred_element_type=jnp.float32)

        is_t = jnp.abs(lab_b - cls) < 0.5               # one-hot target (bool)
        valid = lab_b > -0.5                            # label -1 = padding sentinel

        ax = jnp.abs(x)
        e = jnp.exp(-ax)                                # EUP
        one_p_e = 1.0 + e
        if approx:
            r = pl.reciprocal(one_p_e, approx=True)     # EUP vrcp, no Newton refinement
        else:
            r = 1.0 / one_p_e
        # sigmoid(x) = 1/(1+e) for x>=0, e/(1+e) for x<0  (shares exp(-|x|) with BCE).
        p = jnp.where(x >= 0.0, r, e * r)

        # BCE with logits, numerically stable: max(x,0) - x*t + log(1 + exp(-|x|)).
        bce = jnp.maximum(x, 0.0) - jnp.where(is_t, x, 0.0) + jnp.log(one_p_e)

        # pt = (1-p)*t + p*(1-t) = |p - t|;  modulating factor pt**gamma.
        d = jnp.where(is_t, p - 1.0, p)
        gi = int(gamma)
        if float(gamma) == 2.0:
            mod = d * d                                 # default gamma: no abs needed
        elif float(gamma) == float(gi) and 0 <= gi <= 4:
            pt = jnp.abs(d)
            mod = jnp.ones_like(pt)
            for _ in range(gi):                         # VPU multiplies, no EUP pow
                mod = mod * pt
        else:
            mod = jnp.abs(d) ** gamma
        pre = jnp.where(is_t, alpha_f, one_m_alpha)     # alpha*t + (1-alpha)*(1-t)

        loss = jnp.where(valid, bce * (pre * mod), 0.0)
        # Cross-sublane fold (XLU) instead of a long serial VALU add chain.
        acc = acc + jnp.sum(loss, axis=0, keepdims=True)

    out_ref[0:1, :] = out_ref[0:1, :] + acc


def focal_loss(pred, target, weight=None, *, gamma=2.0, alpha=0.25, loss_weight=1.0,
               reduction="mean", avg_factor=None, num_parallel=1,
               approx_reciprocal=True):
    """Sigmoid focal loss (FocalLoss.forward, use_sigmoid=True).

    pred: (N, C) float logits (f32 or bf16), target: (N,) int in [0, C]
    (label == C means background -> all-zero one-hot row).
    """
    if weight is not None:
        # TODO(synk): sample-wise `weight` tensor not implemented (FocalLoss default is None).
        raise NotImplementedError("sample-wise weight is not supported")
    if reduction not in ("mean", "sum"):
        # TODO(synk): reduction='none' needs a per-element (N, C) output.
        raise NotImplementedError("only 'mean' and 'sum' reductions are fused")

    N, C = pred.shape
    target = target.astype(jnp.int32).reshape(N)

    # Lane-dense grouping: pack g samples per grouped row so the class (lane) axis is a
    # multiple of 128, g = 128 / gcd(C, 128)  (C=80 -> g=8, Ceff=640; C=16 -> g=8).
    # Restricted to C <= 256 (labels exact through the MXU broadcast) and Ceff <= 2048
    # (keeps slab / helper-tile sizes sane); otherwise run ungrouped.
    g = 128 // math.gcd(C, 128)
    if g == 1 or C > 256 or g * C > 2048:
        g = 1
    Ceff = g * C

    # Slab = per-iteration working set (~4 vregs per intermediate); tile = nslab slabs.
    ts = max(8, (4096 // Ceff) // 8 * 8)
    Ng = _round_up(N, g)
    R = Ng // g                                          # grouped rows
    tm = min(ts * 16, max(ts, _round_up(R, ts)))         # <= ~512 KiB pred tile
    nslab = tm // ts

    P = max(1, int(num_parallel))                        # 2 on v7x (2 TCs); 1 on v5e/v6e
    nblocks = pl.cdiv(R, tm)
    steps = pl.cdiv(nblocks, P)
    total_blocks = P * steps
    last_block = nblocks - 1

    # Pred: pad rows only when g does not divide N (needed for the free contiguous
    # reshape (Ng, C) -> (R, g*C)).  Edge / duplicate blocks past R are handled by
    # partial-block reads and masked in-kernel via the -1 label sentinel.
    if Ng != N:
        pred_p = jnp.zeros((Ng, C), pred.dtype).at[:N].set(pred)
    else:
        pred_p = pred
    pred_g = pred_p.reshape(R, Ceff)

    # Labels are tiny: pad them over the full grid range with the -1 sentinel so every
    # out-of-range / garbage pred row is exactly zeroed inside the kernel.
    lab_full = jnp.full((total_blocks * tm * g,), -1, jnp.int32).at[:N].set(target)
    lab_g = lab_full.reshape(total_blocks * tm, g)

    # Constant helper tiles (no per-step iota / div / mod on the VPU).
    lane_cls = np.tile(np.arange(C, dtype=np.float32), g)                     # (Ceff,)
    cls_tile = jnp.asarray(np.tile(lane_cls, (ts, 1)))                        # (ts, Ceff)
    bmat = jnp.asarray(
        (np.arange(Ceff) // C == np.arange(g)[:, None]).astype(np.float32))   # (g, Ceff)

    kernel = functools.partial(_focal_loss_kernel, gamma=float(gamma),
                               alpha=float(alpha), g=g, ts=ts, nslab=nslab,
                               approx=bool(approx_reciprocal))

    partials = pl.pallas_call(
        kernel,
        out_shape=jax.ShapeDtypeStruct((P * 8, Ceff), jnp.float32),
        grid_spec=pltpu.PrefetchScalarGridSpec(
            num_scalar_prefetch=0,
            grid=(P, steps),
            in_specs=[
                pl.BlockSpec((tm, Ceff),
                             lambda p, i: (jnp.minimum(p * steps + i, last_block), 0)),
                pl.BlockSpec((tm, g), lambda p, i: (p * steps + i, 0)),
                pl.BlockSpec((ts, Ceff), lambda p, i: (0, 0)),
                pl.BlockSpec((g, Ceff), lambda p, i: (0, 0)),
            ],
            out_specs=pl.BlockSpec((8, Ceff), lambda p, i: (p, 0)),
        ),
        compiler_params=pltpu.CompilerParams(
            dimension_semantics=("parallel", "arbitrary")),
    )(pred_g, lab_g, cls_tile, bmat)

    total = jnp.sum(partials)

    if reduction == "sum":
        out = total
    else:  # 'mean' (mmdet weight_reduce_loss: sum / avg_factor if given, else mean over N*C)
        denom = jnp.float32(avg_factor) if avg_factor is not None else jnp.float32(N * C)
        out = total / denom
    return loss_weight * out


def _reference(pred, target, *, gamma=2.0, alpha=0.25, loss_weight=1.0,
               reduction="mean", avg_factor=None):
    """Pure-JAX mirror of py_sigmoid_focal_loss (mmdet FocalLoss CPU path)."""
    N, C = pred.shape
    t = jax.nn.one_hot(target, C + 1, dtype=jnp.float32)[:, :C]
    x = pred.astype(jnp.float32)
    p = jax.nn.sigmoid(x)
    pt = (1 - p) * t + p * (1 - t)
    fw = (alpha * t + (1 - alpha) * (1 - t)) * pt ** gamma
    bce = jnp.maximum(x, 0) - x * t + jnp.log1p(jnp.exp(-jnp.abs(x)))
    loss = bce * fw
    if reduction == "mean":
        loss = jnp.sum(loss) / (avg_factor if avg_factor is not None else N * C)
    else:
        loss = jnp.sum(loss)
    return loss_weight * loss


if __name__ == "__main__":
    key = jax.random.PRNGKey(0)
    k1, k2, k3, k4, k5, k6 = jax.random.split(key, 6)

    # Case 1: small class count (C=16 -> g=8, Ceff=128), 'mean'.
    N1, C1 = 64, 16
    pred1 = jax.random.normal(k1, (N1, C1), jnp.float32) * 2.0
    tgt1 = jax.random.randint(k2, (N1,), 0, C1 + 1, dtype=jnp.int32)   # C1 == background
    # 1a: default approx reciprocal (training default) — loose tolerance.
    out1a = jax.block_until_ready(focal_loss(pred1, tgt1))
    ref1 = _reference(pred1, tgt1)
    assert jnp.allclose(out1a, ref1, rtol=5e-2, atol=1e-4), (out1a, ref1)
    # 1b: exact reciprocal — tight tolerance.
    out1b = jax.block_until_ready(focal_loss(pred1, tgt1, approx_reciprocal=False))
    assert jnp.allclose(out1b, ref1, rtol=2e-4, atol=1e-6), (out1b, ref1)

    # Case 2: COCO-like C=80 (g=8, Ceff=640), 'sum', loss_weight, exact reciprocal.
    N2, C2 = 48, 80
    pred2 = jax.random.normal(k3, (N2, C2), jnp.float32) * 2.0
    tgt2 = jax.random.randint(k4, (N2,), 0, C2 + 1, dtype=jnp.int32)
    out2 = jax.block_until_ready(
        focal_loss(pred2, tgt2, reduction="sum", loss_weight=2.0,
                   approx_reciprocal=False))
    ref2 = _reference(pred2, tgt2, reduction="sum", loss_weight=2.0)
    assert jnp.allclose(out2, ref2, rtol=2e-4, atol=1e-5), (out2, ref2)

    # Case 3: larger N: pred row padding (N % g != 0), multi-slab tiles, multi-block
    # grid, 2-way parallel axis (with a clamped duplicate block), avg_factor.
    N3, C3 = 2500, 80
    pred3 = jax.random.normal(k5, (N3, C3), jnp.float32) * 2.0
    tgt3 = jax.random.randint(k6, (N3,), 0, C3 + 1, dtype=jnp.int32)
    out3 = jax.block_until_ready(
        focal_loss(pred3, tgt3, reduction="mean", avg_factor=1234.5,
                   num_parallel=2, approx_reciprocal=False))
    ref3 = _reference(pred3, tgt3, reduction="mean", avg_factor=1234.5)
    assert jnp.allclose(out3, ref3, rtol=2e-4, atol=1e-5), (out3, ref3)

    print("KERNEL_OK")
</pallas_src>

<mosaic_0001>
module attributes {stable_mosaic.version = 11 : i64} {
  func.func @_focal_loss_kernel(%arg0: i32, %arg1: i32, %arg2: memref<32x128xf32, #tpu.memory_space<vmem>>, %arg3: memref<32x8xi32, #tpu.memory_space<vmem>>, %arg4: memref<32x128xf32, #tpu.memory_space<vmem>>, %arg5: memref<8x128xf32, #tpu.memory_space<vmem>>, %arg6: memref<8x128xf32, #tpu.memory_space<vmem>>) attributes {dimension_semantics = [#tpu.dimension_semantics<parallel>, #tpu.dimension_semantics<arbitrary>], iteration_bounds = array<i64: 1, 1>, scalar_prefetch = 0 : i64, scratch_operands = 0 : i64, tpu.core_type = #tpu.core_type<tc>, window_params = [{transform_indices = @transform_0, window_bounds = array<i64: 32, 128>}, {transform_indices = @transform_1, window_bounds = array<i64: 32, 8>}, {pipeline_mode = #tpu.pipeline_mode<synchronous>, transform_indices = @transform_2, window_bounds = array<i64: 32, 128>}, {pipeline_mode = #tpu.pipeline_mode<synchronous>, transform_indices = @transform_3, window_bounds = array<i64: 8, 128>}, {transform_indices = @transform_4, window_bounds = array<i64: 8, 128>}]} {
    %c0_i32 = arith.constant 0 : i32
    %0 = arith.cmpi eq, %arg1, %c0_i32 : i32
    %1 = arith.extui %0 : i1 to i32
    %c0_i32_0 = arith.constant 0 : i32
    %2 = arith.cmpi ne, %1, %c0_i32_0 : i32
    scf.if %2 {
      %cst_25 = arith.constant 0.000000e+00 : f32
      %51 = vector.broadcast %cst_25 : f32 to vector<8x128xf32>
      %c0_26 = arith.constant 0 : index
      %c0_27 = arith.constant 0 : index
      %52 = vector.load %arg6[%c0_26, %c0_27] : memref<8x128xf32, #tpu.memory_space<vmem>>, vector<8x128xf32>
      tpu.vector_store %arg6[%c0_26, %c0_27], %51 {strides = array<i32>} : memref<8x128xf32, #tpu.memory_space<vmem>>, vector<8x128xf32>,
    } else {
    }
    %c0 = arith.constant 0 : index
    %c0_1 = arith.constant 0 : index
    %3 = vector.load %arg4[%c0, %c0_1] : memref<32x128xf32, #tpu.memory_space<vmem>>, vector<32x128xf32>
    %c0_2 = arith.constant 0 : index
    %c0_3 = arith.constant 0 : index
    %4 = vector.load %arg5[%c0_2, %c0_3] : memref<8x128xf32, #tpu.memory_space<vmem>>, vector<8x128xf32>
    %cst = arith.constant 0.000000e+00 : f32
    %5 = vector.broadcast %cst : f32 to vector<1x128xf32>
    %c0_4 = arith.constant 0 : index
    %c0_5 = arith.constant 0 : index
    %6 = vector.load %arg2[%c0_4, %c0_5] : memref<32x128xf32, #tpu.memory_space<vmem>>, vector<32x128xf32>
    %c0_6 = arith.constant 0 : index
    %c0_7 = arith.constant 0 : index
    %7 = vector.load %arg3[%c0_6, %c0_7] : memref<32x8xi32, #tpu.memory_space<vmem>>, vector<32x8xi32>
    %8 = arith.sitofp %7 : vector<32x8xi32> to vector<32x8xf32>
    %cst_8 = arith.constant dense<0.000000e+00> : vector<32x128xf32>
    %9 = tpu.matmul %8, %4, %cst_8 {dimension_numbers = #tpu.dot_dimension_numbers<[1], [0], [0], [1], [0, 0, 1, 1], [], []>} : vector<32x8xf32>, vector<8x128xf32>, vector<32x128xf32> -> vector<32x128xf32>
    %10 = arith.subf %9, %3 : vector<32x128xf32>
    %11 = math.absf %10 : vector<32x128xf32>
    %cst_9 = arith.constant 5.000000e-01 : f32
    %12 = vector.broadcast %cst_9 : f32 to vector<32x128xf32>
    %13 = arith.cmpf olt, %11, %12 : vector<32x128xf32>
    %cst_10 = arith.constant -5.000000e-01 : f32
    %14 = vector.broadcast %cst_10 : f32 to vector<32x128xf32>
    %15 = arith.cmpf ogt, %9, %14 : vector<32x128xf32>
    %16 = math.absf %6 : vector<32x128xf32>
    %cst_11 = arith.constant 0.000000e+00 : f32
    %17 = vector.broadcast %cst_11 : f32 to vector<32x128xf32>
    %18 = arith.subf %17, %16 : vector<32x128xf32>
    %19 = math.exp %18 : vector<32x128xf32>
    %cst_12 = arith.constant 1.000000e+00 : f32
    %20 = vector.broadcast %cst_12 : f32 to vector<32x128xf32>
    %21 = arith.addf %20, %19 : vector<32x128xf32>
    %22 = tpu.reciprocal %21 {approx = true} : vector<32x128xf32> -> vector<32x128xf32>
    %cst_13 = arith.constant 0.000000e+00 : f32
    %23 = vector.broadcast %cst_13 : f32 to vector<32x128xf32>
    %24 = arith.cmpf oge, %6, %23 : vector<32x128xf32>
    %25 = arith.mulf %19, %22 : vector<32x128xf32>
    %26 = arith.select %24, %22, %25 : vector<32x128xi1>, vector<32x128xf32>
    %cst_14 = arith.constant 0.000000e+00 : f32
    %27 = vector.broadcast %cst_14 : f32 to vector<32x128xf32>
    %28 = arith.maximumf %6, %27 : vector<32x128xf32>
    %cst_15 = arith.constant 0.000000e+00 : f32
    %29 = vector.broadcast %cst_15 : f32 to vector<32x128xf32>
    %30 = arith.select %13, %6, %29 : vector<32x128xi1>, vector<32x128xf32>
    %31 = arith.subf %28, %30 : vector<32x128xf32>
    %32 = math.log %21 : vector<32x128xf32>
    %33 = arith.addf %31, %32 : vector<32x128xf32>
    %cst_16 = arith.constant 1.000000e+00 : f32
    %34 = vector.broadcast %cst_16 : f32 to vector<32x128xf32>
    %35 = arith.subf %26, %34 : vector<32x128xf32>
    %36 = arith.select %13, %35, %26 : vector<32x128xi1>, vector<32x128xf32>
    %37 = arith.mulf %36, %36 : vector<32x128xf32>
    %cst_17 = arith.constant 2.500000e-01 : f32
    %cst_18 = arith.constant 7.500000e-01 : f32
    %38 = vector.broadcast %cst_17 : f32 to vector<32x128xf32>
    %39 = vector.broadcast %cst_18 : f32 to vector<32x128xf32>
    %40 = arith.select %13, %38, %39 : vector<32x128xi1>, vector<32x128xf32>
    %41 = arith.mulf %40, %37 : vector<32x128xf32>
    %42 = arith.mulf %33, %41 : vector<32x128xf32>
    %cst_19 = arith.constant 0.000000e+00 : f32
    %43 = vector.broadcast %cst_19 : f32 to vector<32x128xf32>
    %44 = arith.select %15, %42, %43 : vector<32x128xi1>, vector<32x128xf32>
    %cst_20 = arith.constant dense<0.000000e+00> : vector<128xf32>
    %45 = vector.multi_reduction <add>, %44, %cst_20 [0] : vector<32x128xf32> to vector<128xf32>
    %46 = vector.shape_cast %45 : vector<128xf32> to vector<1x128xf32>
    %47 = arith.addf %5, %46 : vector<1x128xf32>
    %c0_21 = arith.constant 0 : index
    %c0_22 = arith.constant 0 : index
    %48 = vector.load %arg6[%c0_21, %c0_22] : memref<8x128xf32, #tpu.memory_space<vmem>>, vector<1x128xf32>
    %49 = arith.addf %48, %47 : vector<1x128xf32>
    %c0_23 = arith.constant 0 : index
    %c0_24 = arith.constant 0 : index
    %50 = vector.load %arg6[%c0_23, %c0_24] : memref<8x128xf32, #tpu.memory_space<vmem>>, vector<1x128xf32>
    tpu.vector_store %arg6[%c0_23, %c0_24], %49 {strides = array<i32>} : memref<8x128xf32, #tpu.memory_space<vmem>>, vector<1x128xf32>,
    return
  }
  func.func @transform_0(%arg0: i32, %arg1: i32) -> (i32, i32) {
    %c1_i32 = arith.constant 1 : i32
    %0 = arith.muli %arg0, %c1_i32 : i32
    %1 = arith.addi %0, %arg1 : i32
    %c0_i32 = arith.constant 0 : i32
    %2 = arith.minsi %1, %c0_i32 : i32
    %c0_i32_0 = arith.constant 0 : i32
    %c0_i32_1 = arith.constant 0 : i32
    return %2, %c0_i32_0 : i32, i32
  }
  func.func @transform_1(%arg0: i32, %arg1: i32) -> (i32, i32) {
    %c1_i32 = arith.constant 1 : i32
    %0 = arith.muli %arg0, %c1_i32 : i32
    %1 = arith.addi %0, %arg1 : i32
    %c0_i32 = arith.constant 0 : i32
    %c0_i32_0 = arith.constant 0 : i32
    return %1, %c0_i32 : i32, i32
  }
  func.func @transform_2(%arg0: i32, %arg1: i32) -> (i32, i32) {
    %c0_i32 = arith.constant 0 : i32
    %c0_i32_0 = arith.constant 0 : i32
    %c0_i32_1 = arith.constant 0 : i32
    return %c0_i32, %c0_i32_0 : i32, i32
  }
  func.func @transform_3(%arg0: i32, %arg1: i32) -> (i32, i32) {
    %c0_i32 = arith.constant 0 : i32
    %c0_i32_0 = arith.constant 0 : i32
    %c0_i32_1 = arith.constant 0 : i32
    return %c0_i32, %c0_i32_0 : i32, i32
  }
  func.func @transform_4(%arg0: i32, %arg1: i32) -> (i32, i32) {
    %c0_i32 = arith.constant 0 : i32
    %c0_i32_0 = arith.constant 0 : i32
    return %arg0, %c0_i32 : i32, i32
  }
}

</mosaic_0001>

<llo_original>
// kernel: tpu_custom_call.1
$region0: #{tpu_custom_call.1}
  #allocation0 [shape = 'u32[]', space=smem, size = 0x4, offset = 0x4, fixed_abs, tag = 'smem constant byte address 0x4 - core index']
  #allocation1 [shape = 'u32[144,128]{1,0:T(1,128)}', space=vmem, size = 0x12000, scoped, tag = 'internal scratch']
  %s0 = inlined_call_operand.vmem [shape: f32[8,128], index: 0, kind: input, shape index: {}]
  %s1 = inlined_call_operand.vmem [shape: s32[32,8], index: 1, kind: input, shape index: {}]
  %s2 = inlined_call_operand.vmem [shape: f32[32,128], index: 2, kind: input, shape index: {}]
  %s3 = inlined_call_operand.vmem [shape: f32[8,128], index: 3, kind: input, shape index: {}]
  %s4 = inlined_call_operand.hbm [shape: f32[8,128], index: 4, kind: output, shape index: {}]
  %s5 = sld [smem:[#allocation0]]
  $region30: #{tpu_custom_call.1} parent=0
    _
  %s7 = ssub.s32 1, %s5
  %s8 = scalar_select 0, %s7, %s5
  $region1: #{tpu_custom_call.1} parent=0
    #allocation2 [shape = 'u8[4096]{0}', space=vmem, size = 0x1000, scoped, tag = 'output window, operand 0, single buffered']
    #allocation3 [shape = 's32[1]{0}', space=sflag, size = 0x4, scoped, tag = 'scoped memory for tpu_custom_call.1']
    %9 = vsyncpa [#allocation3], 0
    // Predicated region
    $region2: #{tpu_custom_call.1} parent=1 // pred_check
      _
    $region3: #{tpu_custom_call.1} parent=1 // pred_check_branch
      %11 = sbr.rel (0) target = $region5
    $region4: #{tpu_custom_call.1} parent=1 // pred_region
      %s12 = sadd.s32 0, 0
      %p13 = scmp.lt.s32.totalorder %s12, 0
      %s14 = scalar_select %p13, %s12, 0
      %s15 = smul.u32 4, %s14
      %s16 = ssub.s32 1, %s15
      %s17 = smul.u32 128, %s16
      %p18 = scmp.lt.s32.totalorder %s15, 0
      %s19 = scalar_select %p18, %s15, 0
      %s20 = smul.addr %s19, 8
      %s21 = scalar_lea.vmem %s0, %s20
      %s22 = sadd.s32 0, 0
      %p23 = scmp.lt.s32.totalorder %s22, 0
      %s24 = scalar_select %p23, %s22, 0
      %s25 = smul.u32 4, %s24
      %s26 = ssub.s32 1, %s25
      %s27 = smul.u32 128, %s26
    $region5: #{tpu_custom_call.1} parent=1 // pred_fallthru
      _
    // Predicated region
    $region6: #{tpu_custom_call.1} parent=1 // pred_check
      _
    $region7: #{tpu_custom_call.1} parent=1 // pred_check_branch
      %29 = sbr.rel (0) target = $region9
    $region8: #{tpu_custom_call.1} parent=1 // pred_region
      %s30 = sadd.s32 0, 0
      %s31 = smul.u32 4, %s30
      %p32 = scmp.lt.s32.totalorder %s31, 3
      %s33 = scalar_select %p32, %s31, 3
      %s34 = smul.addr %s33, 8
      %s35 = scalar_lea.vmem %s1, %s34
      %s36 = sadd.s32 0, 0
      %s37 = smul.u32 4, %s36
    $region9: #{tpu_custom_call.1} parent=1 // pred_fallthru
      _
    // Predicated region
    $region10: #{tpu_custom_call.1} parent=1 // pred_check
      _
    $region11: #{tpu_custom_call.1} parent=1 // pred_check_branch
      %39 = sbr.rel (0) target = $region13
    $region12: #{tpu_custom_call.1} parent=1 // pred_region
      _
    $region13: #{tpu_custom_call.1} parent=1 // pred_fallthru
      _
    // Predicated region
    $region14: #{tpu_custom_call.1} parent=1 // pred_check
      _
    $region15: #{tpu_custom_call.1} parent=1 // pred_check_branch
      %41 = sbr.rel (0) target = $region17
    $region16: #{tpu_custom_call.1} parent=1 // pred_region
      _
    $region17: #{tpu_custom_call.1} parent=1 // pred_fallthru
      _
    %s42 = sadd.s32 0, 0
    %p43 = scmp.lt.s32.totalorder %s42, 0
    %s44 = scalar_select %p43, %s42, 0
    %s45 = smul.u32 4, %s44
    %s46 = ssub.s32 1, %s45
    %s47 = smul.u32 128, %s46
    %p48 = scmp.lt.s32.totalorder %s45, 0
    %s49 = scalar_select %p48, %s45, 0
    %s50 = smul.addr %s49, 8
    %s51 = scalar_lea.vmem %s0, %s50
    %s52 = sadd.s32 0, 0
    %s53 = smul.u32 4, %s52
    %p54 = scmp.lt.s32.totalorder %s53, 3
    %s55 = scalar_select %p54, %s53, 3
    %s56 = smul.addr %s55, 8
    %s57 = scalar_lea.vmem %s1, %s56
    %s58 = sadd.s32 0, 0
    %p59 = scmp.lt.s32.totalorder %s58, 0
    %s60 = scalar_select %p59, %s58, 0
    %s61 = smul.u32 4, %s60
    %s62 = ssub.s32 1, %s61
    %s63 = smul.u32 128, %s62
    %p64 = scmp.lt.s32.totalorder %s61, 0
    %s65 = scalar_select %p64, %s61, 0
    %s66 = smul.addr %s65, 8
    %s67 = scalar_lea.vmem %s0, %s66
    %s68 = sadd.s32 0, 0
    %p69 = scmp.lt.s32.totalorder %s68, 0
    %s70 = scalar_select %p69, %s68, 0
    %s71 = smul.u32 4, %s70
    %s72 = ssub.s32 1, %s71
    %s73 = smul.u32 128, %s72
    %s74 = sadd.s32 0, 0
    %s75 = smul.u32 4, %s74
    %p76 = scmp.lt.s32.totalorder %s75, 3
    %s77 = scalar_select %p76, %s75, 3
    %s78 = smul.addr %s77, 8
    %s79 = scalar_lea.vmem %s1, %s78
    %s80 = sadd.s32 0, 0
    %s81 = smul.u32 4, %s80
    %p82 = scmp.eq.s32.totalorder 0, 0
    // Predicated region
    $region18: #{tpu_custom_call.1} parent=1 // pred_check
      %p83 = pneg %p82
    $region19: #{tpu_custom_call.1} parent=1 // pred_check_branch
      %85 = sbr.rel (%p83) target = $region21
    $region20: #{tpu_custom_call.1} parent=1 // pred_region
      %86 = vst [vmem:[#allocation2] sm:$0xff] 0.0
    $region21: #{tpu_custom_call.1} parent=1 // pred_fallthru
      _
    %v87 = vld [vmem:[%s2] sm:$0xff]
    %v88 = vld [vmem:[%s2 + $0x8] sm:$0xff]
    %v89 = vld [vmem:[%s2 + $0x10] sm:$0xff]
    %v90 = vld [vmem:[%s2 + $0x18] sm:$0xff]
    %v91 = vld [vmem:[%s3] sm:$0xff]
    %v92 = vld [vmem:[%s67] sm:$0xff]
    %v93 = vld [vmem:[%s67 + $0x8] sm:$0xff]
    %v94 = vld [vmem:[%s67 + $0x10] sm:$0xff]
    %v95 = vld [vmem:[%s67 + $0x18] sm:$0xff]
    %v96 = vld [vmem:[%s79] sm:$0xff]
    %v97 = vld [vmem:[%s79 + $0x8] sm:$0xff]
    %v98 = vld [vmem:[%s79 + $0x10] sm:$0xff]
    %v99 = vld [vmem:[%s79 + $0x18] sm:$0xff]
    %v100 = vcvt.s32.f32 %v96
    %v101 = vcvt.s32.f32 %v97
    %v102 = vcvt.s32.f32 %v98
    %v103 = vcvt.s32.f32 %v99
    %vm104 = vcmask 64512
    %v106 = vsel %vm104, %v100, 0
    %v109 = vsel %vm104, %v101, 0
    %v112 = vsel %vm104, %v102, 0
    %v115 = vsel %vm104, %v103, 0
    %117 = vmatprep.subr.mxu0 0.0
    %118 = vmatpush1.msra.mxu0 %v91
    %119 = vmatprep.subr.mxu0 0.0
    %120 = vmatpush1.msra.mxu0 0.0
    %121 = vmatprep.subr.mxu0 0.0
    %122 = vmatpush1.msra.mxu0 0.0
    %123 = vmatprep.subr.mxu0 0.0
    %124 = vmatpush1.msra.mxu0 0.0
    %125 = vmatprep.subr.mxu0 0.0
    %126 = vmatpush1.msra.mxu0 0.0
    %127 = vmatprep.subr.mxu0 0.0
    %128 = vmatpush1.msra.mxu0 0.0
    %129 = vmatprep.subr.mxu0 0.0
    %130 = vmatpush1.msra.mxu0 0.0
    %131 = vmatprep.subr.mxu0 0.0
    %132 = vmatpush1.msra.mxu0 0.0
    %133 = vmatprep.subr.mxu0 0.0
    %134 = vmatpush1.msra.mxu0 0.0
    %135 = vmatprep.subr.mxu0 0.0
    %136 = vmatpush1.msra.mxu0 0.0
    %137 = vmatprep.subr.mxu0 0.0
    %138 = vmatpush1.msra.mxu0 0.0
    %139 = vmatprep.subr.mxu0 0.0
    %140 = vmatpush1.msra.mxu0 0.0
    %141 = vmatprep.subr.mxu0 0.0
    %142 = vmatpush1.msra.mxu0 0.0
    %143 = vmatprep.subr.mxu0 0.0
    %144 = vmatpush1.msra.mxu0 0.0
    %145 = vmatprep.subr.mxu0 0.0
    %146 = vmatpush1.msra.mxu0 0.0
    %147 = vmatprep.subr.mxu0 0.0
    %148 = vmatpush1.msra.mxu0 0.0
    %149 = vmatprep.subr.mxu0 0.0
    %150 = vmatpush1.msra.mxu0 0.0
    %151 = vmatprep.subr.mxu0 0.0
    %152 = vmatpush1.msra.mxu0 0.0
    %153 = vmatprep.subr.mxu0 0.0
    %154 = vmatpush1.msra.mxu0 0.0
    %155 = vmatprep.subr.mxu0 0.0
    %156 = vmatpush1.msra.mxu0 0.0
    %157 = vmatprep.subr.mxu0 0.0
    %158 = vmatpush1.msra.mxu0 0.0
    %159 = vmatprep.subr.mxu0 0.0
    %160 = vmatpush1.msra.mxu0 0.0
    %161 = vmatprep.subr.mxu0 0.0
    %162 = vmatpush1.msra.mxu0 0.0
    %163 = vmatprep.subr.mxu0 0.0
    %164 = vmatpush1.msra.mxu0 0.0
    %165 = vmatprep.subr.mxu0 0.0
    %166 = vmatpush1.msra.mxu0 0.0
    %167 = vmatprep.subr.mxu0 0.0
    %168 = vmatpush1.msra.mxu0 0.0
    %169 = vmatprep.subr.mxu0 0.0
    %170 = vmatpush1.msra.mxu0 0.0
    %171 = vmatprep.subr.mxu0 0.0
    %172 = vmatpush1.msra.mxu0 0.0
    %173 = vmatprep.subr.mxu0 0.0
    %174 = vmatpush1.msra.mxu0 0.0
    %175 = vmatprep.subr.mxu0 0.0
    %176 = vmatpush1.msra.mxu0 0.0
    %177 = vmatprep.subr.mxu0 0.0
    %178 = vmatpush1.msra.mxu0 0.0
    %179 = vmatprep.subr.mxu0 0.0
    %180 = vmatpush1.msra.mxu0 0.0
    %181 = vmatprep.mubr.f32.mxu0 0.0
    %182 = vmatmul.mubr.f32.gmra.mrb[0].mxu0 %v106
    %v183 = vpop.f32.mrb[0].mxu0
    %v184 = vadd.f32 0.0, %v183
    %v185 = vpop.f32.mrb[0].mxu0
    %186 = vmatprep.mubr.f32.mxu0 0.0
    %187 = vmatmul.mubr.f32.gmra.mrb[0].mxu0 %v109
    %v188 = vpop.f32.mrb[0].mxu0
    %v189 = vadd.f32 0.0, %v188
    %v190 = vpop.f32.mrb[0].mxu0
    %191 = vmatprep.mubr.f32.mxu0 0.0
    %192 = vmatmul.mubr.f32.gmra.mrb[0].mxu0 %v112
    %v193 = vpop.f32.mrb[0].mxu0
    %v194 = vadd.f32 0.0, %v193
    %v195 = vpop.f32.mrb[0].mxu0
    %196 = vmatprep.mubr.f32.mxu0 0.0
    %197 = vmatmul.mubr.f32.gmra.mrb[0].mxu0 %v115
    %v198 = vpop.f32.mrb[0].mxu0
    %v199 = vadd.f32 0.0, %v198
    %v200 = vpop.f32.mrb[0].mxu0
    %201 = vdwg.mxu0
    %v202 = vsub.f32 %v184, %v87
    %v203 = vsub.f32 %v189, %v88
    %v204 = vsub.f32 %v194, %v89
    %v205 = vsub.f32 %v199, %v90
    %v206 = vand.u32 2147483647, %v202
    %v207 = vand.u32 2147483647, %v203
    %v208 = vand.u32 2147483647, %v204
    %v209 = vand.u32 2147483647, %v205
    %vm210 = vcmp.lt.f32.partialorder %v206, 0.5
    %vm211 = vcmp.lt.f32.partialorder %v207, 0.5
    %vm212 = vcmp.lt.f32.partialorder %v208, 0.5
    %vm213 = vcmp.lt.f32.partialorder %v209, 0.5
    %vm214 = vcmp.gt.f32.partialorder %v184, -0.5
    %vm215 = vcmp.gt.f32.partialorder %v189, -0.5
    %vm216 = vcmp.gt.f32.partialorder %v194, -0.5
    %vm217 = vcmp.gt.f32.partialorder %v199, -0.5
    %v218 = vand.u32 2147483647, %v92
    %v219 = vand.u32 2147483647, %v93
    %v220 = vand.u32 2147483647, %v94
    %v221 = vand.u32 2147483647, %v95
    %v222 = vsub.f32 0.0, %v218
    %v223 = vsub.f32 0.0, %v219
    %v224 = vsub.f32 0.0, %v220
    %v225 = vsub.f32 0.0, %v221
    %v226 = vmul.f32 %v222, 1.442695
    %v227 = vpow.pop %v226
    %v228 = vmul.f32 %v223, 1.442695
    %v229 = vpow.pop %v228
    %v230 = vmul.f32 %v224, 1.442695
    %v231 = vpow.pop %v230
    %v232 = vmul.f32 %v225, 1.442695
    %v233 = vpow.pop %v232
    %v234 = vadd.f32 %v227, 1.0
    %v235 = vadd.f32 %v229, 1.0
    %v236 = vadd.f32 %v231, 1.0
    %v237 = vadd.f32 %v233, 1.0
    %v238 = vrcp.pop %v234
    %v239 = vrcp.pop %v235
    %v240 = vrcp.pop %v236
    %v241 = vrcp.pop %v237
    %vm242 = vcmp.ge.f32.partialorder %v92, 0.0
    %vm243 = vcmp.ge.f32.partialorder %v93, 0.0
    %vm244 = vcmp.ge.f32.partialorder %v94, 0.0
    %vm245 = vcmp.ge.f32.partialorder %v95, 0.0
    %v246 = vmul.f32 %v227, %v238
    %v247 = vmul.f32 %v229, %v239
    %v248 = vmul.f32 %v231, %v240
    %v249 = vmul.f32 %v233, %v241
    %v250 = vsel %vm242, %v238, %v246
    %v251 = vsel %vm243, %v239, %v247
    %v252 = vsel %vm244, %v240, %v248
    %v253 = vsel %vm245, %v241, %v249
    %v254 = vmax.f32 %v92, 0.0
    %v255 = vmax.f32 %v93, 0.0
    %v256 = vmax.f32 %v94, 0.0
    %v257 = vmax.f32 %v95, 0.0
    %v258 = vsel %vm210, %v92, 0.0
    %v259 = vsel %vm211, %v93, 0.0
    %v260 = vsel %vm212, %v94, 0.0
    %v261 = vsel %vm213, %v95, 0.0
    %v262 = vsub.f32 %v254, %v258
    %v263 = vsub.f32 %v255, %v259
    %v264 = vsub.f32 %v256, %v260
    %v265 = vsub.f32 %v257, %v261
    %v266 = vlog2.pop %v234
    %v267 = vmul.f32 %v266, 0.6931472
    %v268 = vlog2.pop %v235
    %v269 = vmul.f32 %v268, 0.6931472
    %v270 = vlog2.pop %v236
    %v271 = vmul.f32 %v270, 0.6931472
    %v272 = vlog2.pop %v237
    %v273 = vmul.f32 %v272, 0.6931472
    %v274 = vadd.f32 %v262, %v267
    %v275 = vadd.f32 %v263, %v269
    %v276 = vadd.f32 %v264, %v271
    %v277 = vadd.f32 %v265, %v273
    %v278 = vsub.f32 %v250, 1.0
    %v279 = vsub.f32 %v251, 1.0
    %v280 = vsub.f32 %v252, 1.0
    %v281 = vsub.f32 %v253, 1.0
    %v282 = vsel %vm210, %v278, %v250
    %v283 = vsel %vm211, %v279, %v251
    %v284 = vsel %vm212, %v280, %v252
    %v285 = vsel %vm213, %v281, %v253
    %v286 = vmul.f32 %v282, %v282
    %v287 = vmul.f32 %v283, %v283
    %v288 = vmul.f32 %v284, %v284
    %v289 = vmul.f32 %v285, %v285
    %v290 = vsel %vm210, 0.25, 0.75
    %v291 = vsel %vm211, 0.25, 0.75
    %v292 = vsel %vm212, 0.25, 0.75
    %v293 = vsel %vm213, 0.25, 0.75
    %v294 = vmul.f32 %v290, %v286
    %v295 = vmul.f32 %v291, %v287
    %v296 = vmul.f32 %v292, %v288
    %v297 = vmul.f32 %v293, %v289
    %v298 = vmul.f32 %v274, %v294
    %v299 = vmul.f32 %v275, %v295
    %v300 = vmul.f32 %v276, %v296
    %v301 = vmul.f32 %v277, %v297
    %v302 = vsel %vm214, %v298, 0.0
    %v303 = vsel %vm215, %v299, 0.0
    %v304 = vsel %vm216, %v300, 0.0
    %v305 = vsel %vm217, %v301, 0.0
    %v306 = vadd.f32 %v302, %v303
    %v307 = vadd.f32 %v306, %v304
    %v308 = vadd.f32 %v307, %v305
    %v309 = vrot.slane %v308, 4
    %v310 = vadd.f32 %v308, %v309
    %v311 = vrot.slane %v310, 2
    %v312 = vadd.f32 %v310, %v311
    %v313 = vrot.slane %v312, 1
    %v314 = vadd.f32 %v312, %v313
    %v315 = vadd.f32 %v314, 0.0
    %v316 = vld [vmem:[#allocation2] sm:$0x1]
    %v317 = vadd.f32 %v316, %v315
    %318 = vst [vmem:[#allocation2] sm:$0x1] %v317
    // Predicated region
    $region22: #{tpu_custom_call.1} parent=1 // pred_check
      _
    $region23: #{tpu_custom_call.1} parent=1 // pred_check_branch
      %320 = sbr.rel (0) target = $region25
    $region24: #{tpu_custom_call.1} parent=1 // pred_region
      %s322 = ssub.s32 128, 128
      %323 = vsyncadd [#allocation3], %s322
      %s325 = sshll.u32 [#allocation2], 4
      %s326 = int_to_ptr.vmem [resolvable:$true] %s325
      %328 = dma.vmem_to_hbm [thread:$0]  %s326, 128, %s4, [#allocation3]
    $region25: #{tpu_custom_call.1} parent=1 // pred_fallthru
      _
    // Predicated region
    $region26: #{tpu_custom_call.1} parent=1 // pred_check
      _
    $region27: #{tpu_custom_call.1} parent=1 // pred_check_branch
      %330 = sbr.rel (0) target = $region29
    $region28: #{tpu_custom_call.1} parent=1 // pred_region
      %331 = dma.done [#allocation3], 128
    $region29: #{tpu_custom_call.1} parent=1 // pred_fallthru
      _
    %332 = vsyncpa [#allocation3], 1

</llo_original>
